<compile_context>
chip_gen: v7x
topology: tpu7x:2x2x1
jax: 0.10.0
libtpu: 0.0.40
codegen_flags: <defaults>
</compile_context>

<pallas_src>
import functools
import math

import jax
import jax.numpy as jnp
from jax.experimental import pallas as pl
from jax.experimental.pallas import tpu as pltpu


def _round_up(x, m):
    return ((x + m - 1) // m) * m


def _cdiv(a, b):
    return -(-a // b)


def _vmem_caps():
    """(tile budget, vmem_limit_bytes), generation-aware with a safe fallback."""
    cap = None
    try:
        info = pltpu.get_tpu_info()
        cap = getattr(info, "vmem_capacity_bytes", None)
    except Exception:
        cap = None
    if not cap:
        cap = 64 << 20  # conservative: v7x per-TensorCore VMEM
    budget = int(cap * 0.55)
    limit = max(int(cap * 0.80), 32 << 20)
    return budget, limit


def prepare_dim_converter_params(w_t, b, compute_dtype=jnp.bfloat16):
    """One-time parameter prep (call once, reuse every forward step).

    w_t : (stu_hidden, tea_hidden)  -- transpose of torch's Linear.weight
    b   : (tea_hidden,)
    Returns (w_padded, b_padded_row, n_valid) where tea_hidden is zero-padded
    up to a multiple of 128 (lane-dense output) and the weight is cast to the
    MXU compute dtype.
    """
    K, N = w_t.shape
    n_pad = _round_up(N, 128)
    if n_pad != N:
        w_t = jnp.pad(w_t, ((0, 0), (0, n_pad - N)))
        b = jnp.pad(b, (0, n_pad - N))
    if compute_dtype is not None:
        w_t = w_t.astype(compute_dtype)
    b = b.reshape(1, n_pad).astype(jnp.float32)
    return w_t, b, N


def _make_linear_kernel(compute_dtype, k_tiled):
    def _cast(v):
        if compute_dtype is not None and v.dtype != compute_dtype:
            return v.astype(compute_dtype)
        return v

    if not k_tiled:
        def kernel(x_ref, w_ref, b_ref, o_ref):
            acc = jnp.dot(_cast(x_ref[...]), _cast(w_ref[...]),
                          preferred_element_type=jnp.float32)
            o_ref[...] = (acc + b_ref[...].astype(jnp.float32)).astype(o_ref.dtype)
        return kernel

    def kernel(x_ref, w_ref, b_ref, o_ref, acc_ref):
        k = pl.program_id(2)

        @pl.when(k == 0)
        def _():
            acc_ref[...] = jnp.zeros_like(acc_ref)

        acc_ref[...] += jnp.dot(_cast(x_ref[...]), _cast(w_ref[...]),
                                preferred_element_type=jnp.float32)

        @pl.when(k == pl.num_programs(2) - 1)
        def _():
            o_ref[...] = (acc_ref[...] + b_ref[...].astype(jnp.float32)
                          ).astype(o_ref.dtype)

    return kernel


def _pick_tiles(M, K, N_pad, x_isz, w_isz, o_isz, tm, tn, tk, budget):
    """Pick (tm, tn, tk) under a generation-aware VMEM budget."""
    tm_auto, tk_auto = tm is None, tk is None
    if tk is None:
        tk = K

    if tn is None:
        tn = N_pad
        # Shrink the N block if the (double-buffered) weight tile is too big.
        while tn > 128 and 2 * tk * tn * w_isz > budget // 2:
            half = tn // 2
            tn = max(128, _round_up(half, 256) if half >= 256 else _round_up(half, 128))

    def fits(tm_, tk_):
        acc = tm_ * tn * 4 if tk_ < K else 0            # f32 accumulator scratch
        return (2 * tm_ * tk_ * x_isz                   # x tile (double-buffered)
                + 2 * tk_ * tn * w_isz                  # weight tile
                + 2 * tm_ * tn * o_isz                  # output tile
                + 2 * tn * 4                            # f32 bias row
                + acc) <= budget

    if tm is None:
        tm = min(2048, _round_up(M, 8))
        while tm > 16 and not fits(tm, tk):
            half = tm // 2
            tm = max(16, _round_up(half, 256) if half >= 256 else _round_up(half, 8))

    # Extreme stu_hidden: tile the contraction axis when it divides cleanly.
    if tk_auto:
        while not fits(tm, tk) and tk % 256 == 0:
            tk //= 2

    # Guarantee >=2 programs on a 'parallel' axis so both v7x TCs get work.
    if tm_auto and _cdiv(M, tm) == 1 and _cdiv(N_pad, tn) == 1 and M >= 512:
        half = _cdiv(M, 2)
        tm = _round_up(half, 256) if half >= 256 else _round_up(half, 8)

    return tm, tn, tk


@functools.partial(
    jax.jit,
    static_argnames=("n_valid", "tm", "tn", "tk", "compute_dtype", "out_dtype",
                     "force_pallas"),
)
def dim_converter_forward(x, w_t, b, *, n_valid=None, tm=None, tn=None, tk=None,
                          compute_dtype=jnp.bfloat16, out_dtype=None,
                          force_pallas=False):
    """y = x @ w_t + b, matching torch.nn.Linear(stu_hidden, tea_hidden).

    x   : (..., stu_hidden)
    w_t : (stu_hidden, tea_hidden[_padded])   (transpose of torch's weight;
          ideally pre-processed with prepare_dim_converter_params)
    b   : (tea_hidden,) or (1, tea_hidden_padded) f32
    n_valid : true tea_hidden when padded params are passed.
    """
    orig_shape = x.shape
    K = orig_shape[-1]
    Nw = w_t.shape[-1]
    N = Nw if n_valid is None else n_valid
    M = math.prod(orig_shape[:-1]) if len(orig_shape) > 1 else 1
    if out_dtype is None:
        out_dtype = x.dtype

    # Tiny problems: kernel-launch + grid-step overhead dwarfs the work; let
    # XLA fuse the matmul instead.
    if not force_pallas and 2 * M * K * N < (1 << 24):
        b_flat = b.reshape(-1)[:N]
        y = jnp.dot(x, w_t[..., :N].astype(x.dtype)) + b_flat.astype(x.dtype)
        return y.astype(out_dtype)

    x2 = x.reshape(M, K)

    # Lane-dense output: pad N up to a multiple of 128 (no-op when the params
    # were prepared once with prepare_dim_converter_params).
    N_pad = _round_up(Nw, 128)
    if N_pad != Nw:
        w_t = jnp.pad(w_t, ((0, 0), (0, N_pad - Nw)))
        b = jnp.pad(b.reshape(-1), (0, N_pad - Nw))
    b2 = b.reshape(1, N_pad).astype(jnp.float32)
    w2 = w_t  # any dtype cast happens on the VPU inside the kernel

    x_isz = jnp.dtype(x2.dtype).itemsize
    w_isz = jnp.dtype(w2.dtype).itemsize
    o_isz = jnp.dtype(out_dtype).itemsize

    budget, vmem_limit = _vmem_caps()
    tm, tn, tk = _pick_tiles(M, K, N_pad, x_isz, w_isz, o_isz, tm, tn, tk, budget)
    # K tiling only when it divides cleanly and stays 128-aligned (x last dim).
    if tk != K and (K % tk != 0 or tk % 128 != 0):
        tk = K

    m_blocks = _cdiv(M, tm)
    n_blocks = _cdiv(N_pad, tn)
    k_tiled = tk < K
    kernel = _make_linear_kernel(compute_dtype, k_tiled)

    if not k_tiled:
        # Choose grid-axis order by redundant refetch traffic.
        swap = False
        if n_blocks > 1:
            w_refetch = m_blocks * K * N_pad * w_isz   # weight streamed per M block
            x_refetch = n_blocks * M * K * x_isz       # x streamed per N block
            swap = x_refetch < w_refetch
        if not swap:
            grid = (m_blocks, n_blocks)
            x_map = lambda i, j: (i, 0)
            w_map = lambda i, j: (0, j)
            b_map = lambda i, j: (0, j)
            o_map = lambda i, j: (i, j)
            x_reads, w_reads = 1, m_blocks
        else:
            grid = (n_blocks, m_blocks)
            x_map = lambda j, i: (i, 0)
            w_map = lambda j, i: (0, j)
            b_map = lambda j, i: (0, j)
            o_map = lambda j, i: (i, j)
            x_reads, w_reads = n_blocks, 1
        in_specs = [pl.BlockSpec((tm, tk), x_map),
                    pl.BlockSpec((tk, tn), w_map),
                    pl.BlockSpec((1, tn), b_map)]
        out_spec = pl.BlockSpec((tm, tn), o_map)
        scratch = []
        semantics = ("parallel", "parallel")
    else:
        k_blocks = _cdiv(K, tk)
        grid = (m_blocks, n_blocks, k_blocks)
        in_specs = [pl.BlockSpec((tm, tk), lambda i, j, k: (i, k)),
                    pl.BlockSpec((tk, tn), lambda i, j, k: (k, j)),
                    pl.BlockSpec((1, tn), lambda i, j, k: (0, j))]
        out_spec = pl.BlockSpec((tm, tn), lambda i, j, k: (i, j))
        scratch = [pltpu.VMEM((tm, tn), jnp.float32)]
        semantics = ("parallel", "parallel", "arbitrary")
        x_reads, w_reads = n_blocks, m_blocks

    cost = pl.CostEstimate(
        flops=2 * M * K * N_pad,
        transcendentals=0,
        bytes_accessed=(x_reads * M * K * x_isz
                        + w_reads * K * N_pad * w_isz
                        + M * N_pad * o_isz
                        + N_pad * 4),
    )

    out = pl.pallas_call(
        kernel,
        out_shape=jax.ShapeDtypeStruct((M, N_pad), out_dtype),
        grid_spec=pltpu.PrefetchScalarGridSpec(
            num_scalar_prefetch=0,
            grid=grid,
            in_specs=in_specs,
            out_specs=out_spec,
            scratch_shapes=scratch,
        ),
        compiler_params=pltpu.CompilerParams(
            dimension_semantics=semantics,
            vmem_limit_bytes=vmem_limit,
        ),
        cost_estimate=cost,
    )(x2, w2, b2)

    if N_pad != N:
        out = out[:, :N]
    return out.reshape(*orig_shape[:-1], N)


if __name__ == "__main__":
    # config.stu_hidden_size = 32, config.tea_hidden_size = 64
    batch, seq, stu_hidden, tea_hidden = 2, 8, 32, 64

    key = jax.random.PRNGKey(0)
    kx, kw, kb = jax.random.split(key, 3)

    x = jax.random.normal(kx, (batch, seq, stu_hidden), dtype=jnp.float32)
    # Deterministic "Linear" params; stored pre-transposed: (stu, tea).
    w_t = (jax.random.normal(kw, (stu_hidden, tea_hidden), dtype=jnp.float32)
           * (1.0 / jnp.sqrt(stu_hidden)))
    b = jax.random.normal(kb, (tea_hidden,), dtype=jnp.float32) * 0.01

    y_ref = x @ w_t + b

    # One-time parameter prep (pad tea_hidden to a lane multiple, bf16 weight).
    w_p, b_p, n_valid = prepare_dim_converter_params(w_t, b)

    # Force the Pallas path (demo shape is below the small-size fallback
    # threshold) so the kernel itself is exercised.
    y = dim_converter_forward(x, w_p, b_p, n_valid=n_valid, force_pallas=True)
    jax.block_until_ready(y)
    assert y.shape == (batch, seq, tea_hidden)
    assert jnp.allclose(y, y_ref, atol=5e-2, rtol=5e-2), float(
        jnp.max(jnp.abs(y - y_ref)))

    # Exact f32 path (no bf16 cast), un-prepared params, still through Pallas.
    y32 = dim_converter_forward(x, w_t, b, compute_dtype=None, force_pallas=True)
    jax.block_until_ready(y32)
    assert jnp.allclose(y32, y_ref, atol=1e-4, rtol=1e-4)

    # Small-size XLA fallback path is numerically exact.
    y_fb = dim_converter_forward(x, w_t, b)
    jax.block_until_ready(y_fb)
    assert jnp.allclose(y_fb, y_ref, atol=1e-5, rtol=1e-5)

    # Exercise the K-tiled (f32 accumulator) path on a larger hidden size.
    M2, K2, N2 = 64, 256, 128
    kx2, kw2, kb2 = jax.random.split(jax.random.PRNGKey(1), 3)
    x_big = jax.random.normal(kx2, (M2, K2), dtype=jnp.float32)
    w_big = (jax.random.normal(kw2, (K2, N2), dtype=jnp.float32)
             * (1.0 / jnp.sqrt(K2)))
    b_big = jax.random.normal(kb2, (N2,), dtype=jnp.float32) * 0.01
    y_big = dim_converter_forward(x_big, w_big, b_big, tk=128,
                                  compute_dtype=None, force_pallas=True)
    jax.block_until_ready(y_big)
    assert jnp.allclose(y_big, x_big @ w_big + b_big, atol=1e-4, rtol=1e-4)

    print("KERNEL_OK")
</pallas_src>

<mosaic_0001>
module attributes {stable_mosaic.version = 11 : i64} {
  func.func @kernel(%arg0: i32, %arg1: i32, %arg2: memref<16x32xf32, #tpu.memory_space<vmem>>, %arg3: memref<32x128xbf16, #tpu.memory_space<vmem>>, %arg4: memref<1x128xf32, #tpu.memory_space<vmem>>, %arg5: memref<16x128xf32, #tpu.memory_space<vmem>>) attributes {dimension_semantics = [#tpu.dimension_semantics<parallel>, #tpu.dimension_semantics<parallel>], iteration_bounds = array<i64: 1, 1>, scalar_prefetch = 0 : i64, scratch_operands = 0 : i64, tpu.core_type = #tpu.core_type<tc>, window_params = [{transform_indices = @transform_0, window_bounds = array<i64: 16, 32>}, {transform_indices = @transform_1, window_bounds = array<i64: 32, 128>}, {transform_indices = @transform_2, window_bounds = array<i64: 1, 128>}, {transform_indices = @transform_3, window_bounds = array<i64: 16, 128>}]} {
    %c0 = arith.constant 0 : index
    %c0_0 = arith.constant 0 : index
    %0 = vector.load %arg2[%c0, %c0_0] : memref<16x32xf32, #tpu.memory_space<vmem>>, vector<16x32xf32>
    %1 = arith.truncf %0 : vector<16x32xf32> to vector<16x32xbf16>
    %c0_1 = arith.constant 0 : index
    %c0_2 = arith.constant 0 : index
    %2 = vector.load %arg3[%c0_1, %c0_2] : memref<32x128xbf16, #tpu.memory_space<vmem>>, vector<32x128xbf16>
    %cst = arith.constant dense<0.000000e+00> : vector<16x128xf32>
    %3 = tpu.matmul %1, %2, %cst {dimension_numbers = #tpu.dot_dimension_numbers<[1], [0], [0], [1], [0, 0, 1, 1], [], []>} : vector<16x32xbf16>, vector<32x128xbf16>, vector<16x128xf32> -> vector<16x128xf32>
    %c0_3 = arith.constant 0 : index
    %c0_4 = arith.constant 0 : index
    %4 = vector.load %arg4[%c0_3, %c0_4] : memref<1x128xf32, #tpu.memory_space<vmem>>, vector<1x128xf32>
    %5 = vector.broadcast %4 : vector<1x128xf32> to vector<16x128xf32>
    %6 = arith.addf %3, %5 : vector<16x128xf32>
    %c0_5 = arith.constant 0 : index
    %c0_6 = arith.constant 0 : index
    %7 = vector.load %arg5[%c0_5, %c0_6] : memref<16x128xf32, #tpu.memory_space<vmem>>, vector<16x128xf32>
    tpu.vector_store %arg5[%c0_5, %c0_6], %6 {strides = array<i32>} : memref<16x128xf32, #tpu.memory_space<vmem>>, vector<16x128xf32>,
    return
  }
  func.func @transform_0(%arg0: i32, %arg1: i32) -> (i32, i32) {
    %c0_i32 = arith.constant 0 : i32
    %c0_i32_0 = arith.constant 0 : i32
    return %arg0, %c0_i32 : i32, i32
  }
  func.func @transform_1(%arg0: i32, %arg1: i32) -> (i32, i32) {
    %c0_i32 = arith.constant 0 : i32
    %c0_i32_0 = arith.constant 0 : i32
    return %c0_i32, %arg1 : i32, i32
  }
  func.func @transform_2(%arg0: i32, %arg1: i32) -> (i32, i32) {
    %c0_i32 = arith.constant 0 : i32
    %c0_i32_0 = arith.constant 0 : i32
    return %c0_i32, %arg1 : i32, i32
  }
  func.func @transform_3(%arg0: i32, %arg1: i32) -> (i32, i32) {
    %c0_i32 = arith.constant 0 : i32
    return %arg0, %arg1 : i32, i32
  }
}

</mosaic_0001>

<llo_original>
// kernel: dim_converter_forward.1
$region0: #{dim_converter_forward.1}
  #allocation0 [shape = 'u32[]', space=smem, size = 0x4, offset = 0x4, fixed_abs, tag = 'smem constant byte address 0x4 - core index']
  #allocation1 [shape = 'u32[144,128]{1,0:T(1,128)}', space=vmem, size = 0x12000, scoped, tag = 'internal scratch']
  %s0 = inlined_call_operand.hbm [shape: f32[16,32], index: 0, kind: input, shape index: {}]
  %s1 = inlined_call_operand.hbm [shape: bf16[32,128], index: 1, kind: input, shape index: {}]
  %s2 = inlined_call_operand.vmem [shape: f32[1,128], index: 2, kind: input, shape index: {}]
  %s3 = inlined_call_operand.vmem [shape: f32[16,128], index: 3, kind: output, shape index: {}]
  %s4 = sld [smem:[#allocation0]]
  $region30: #{dim_converter_forward.1} parent=0
    _
  %s6 = ssub.s32 1, %s4
  %s7 = scalar_select 0, %s6, %s4
  $region1: #{dim_converter_forward.1} parent=0
    #allocation2 [shape = 'u8[8192]{0}', space=vmem, size = 0x2000, scoped, tag = 'input window, operand 0, single buffered']
    #allocation3 [shape = 's32[1]{0}', space=sflag, size = 0x4, scoped, tag = 'scoped memory for dim_converter_forward.1']
    #allocation4 [shape = 'u8[8192]{0}', space=vmem, size = 0x2000, scoped, tag = 'input window, operand 1, single buffered']
    #allocation5 [shape = 's32[1]{0}', space=sflag, size = 0x4, scoped, tag = 'scoped memory for dim_converter_forward.1']
    %8 = vsyncpa [#allocation3], 0
    %9 = vsyncpa [#allocation5], 0
    // Predicated region
    $region2: #{dim_converter_forward.1} parent=1 // pred_check
      _
    $region3: #{dim_converter_forward.1} parent=1 // pred_check_branch
      %11 = sbr.rel (0) target = $region5
    $region4: #{dim_converter_forward.1} parent=1 // pred_region
      %s13 = ssub.s32 256, 256
      %14 = vsyncadd [#allocation3], %s13
      %s15 = sshll.u32 [#allocation2], 4
      %s16 = int_to_ptr.vmem [resolvable:$true] %s15
      %21 = dma.hbm_to_vmem [thread:$0]  %s0, 256, %s16, [#allocation3], 128, 128, 8
    $region5: #{dim_converter_forward.1} parent=1 // pred_fallthru
      _
    // Predicated region
    $region6: #{dim_converter_forward.1} parent=1 // pred_check
      _
    $region7: #{dim_converter_forward.1} parent=1 // pred_check_branch
      %23 = sbr.rel (0) target = $region9
    $region8: #{dim_converter_forward.1} parent=1 // pred_region
      %s25 = ssub.s32 256, 256
      %26 = vsyncadd [#allocation5], %s25
      %s27 = sshll.u32 [#allocation4], 4
      %s28 = int_to_ptr.vmem [resolvable:$true] %s27
      %33 = dma.hbm_to_vmem [thread:$0]  %s1, 256, %s28, [#allocation5], 64, 64, 4
    $region9: #{dim_converter_forward.1} parent=1 // pred_fallthru
      _
    // Predicated region
    $region10: #{dim_converter_forward.1} parent=1 // pred_check
      _
    $region11: #{dim_converter_forward.1} parent=1 // pred_check_branch
      %35 = sbr.rel (0) target = $region13
    $region12: #{dim_converter_forward.1} parent=1 // pred_region
      _
    $region13: #{dim_converter_forward.1} parent=1 // pred_fallthru
      _
    // Predicated region
    $region14: #{dim_converter_forward.1} parent=1 // pred_check
      _
    $region15: #{dim_converter_forward.1} parent=1 // pred_check_branch
      %37 = sbr.rel (0) target = $region17
    $region16: #{dim_converter_forward.1} parent=1 // pred_region
      %38 = dma.done [#allocation3], 256
    $region17: #{dim_converter_forward.1} parent=1 // pred_fallthru
      _
    // Predicated region
    $region18: #{dim_converter_forward.1} parent=1 // pred_check
      _
    $region19: #{dim_converter_forward.1} parent=1 // pred_check_branch
      %40 = sbr.rel (0) target = $region21
    $region20: #{dim_converter_forward.1} parent=1 // pred_region
      %41 = dma.done [#allocation5], 256
    $region21: #{dim_converter_forward.1} parent=1 // pred_fallthru
      _
    %v43 = vld [vmem:[#allocation2] sm:$0xff]
    %v44 = vld [vmem:[#allocation2 + $0x8] sm:$0xff]
    %v45 = vpack.c.bf16 %v44, %v43
    %v46 = vld [vmem:[#allocation4] sm:$0xf]
    %v47 = vld [vmem:[#allocation4 + $0x4] sm:$0xf]
    %v48 = vld [vmem:[#allocation4 + $0x8] sm:$0xf]
    %v49 = vld [vmem:[#allocation4 + $0xc] sm:$0xf]
    %v50 = vld [vmem:[%s2] sm:$0x1]
    %v52 = vlaneseq
    %v53 = vshrl.u32 %v52, 7
    %v54 = vsub.s32 0, %v53
    %v55 = vrot.slane %v50, %v54
    %v61 = vunpack.c.l.b16 %v46
    %v62 = vunpack.c.l.b16 %v47
    %v63 = vunpack.c.l.b16 %v48
    %v64 = vunpack.c.l.b16 %v49
    %v65 = vpack.c.b16 %v62, %v61
    %v66 = vpack.c.b16 %v64, %v63
    %vm69 = vcmask 261120
    %v71 = vsel %vm69, %v45, 0
    %73 = vmatprep.subr.bf16.mxu0 0
    %74 = vmatpush1.bf16.msra.mxu0 %v65
    %75 = vmatprep.subr.bf16.mxu0 0
    %76 = vmatpush1.bf16.msra.mxu0 %v66
    %77 = vmatprep.subr.bf16.mxu0 0
    %78 = vmatpush1.bf16.msra.mxu0 0
    %79 = vmatprep.subr.bf16.mxu0 0
    %80 = vmatpush1.bf16.msra.mxu0 0
    %81 = vmatprep.subr.bf16.mxu0 0
    %82 = vmatpush1.bf16.msra.mxu0 0
    %83 = vmatprep.subr.bf16.mxu0 0
    %84 = vmatpush1.bf16.msra.mxu0 0
    %85 = vmatprep.subr.bf16.mxu0 0
    %86 = vmatpush1.bf16.msra.mxu0 0
    %87 = vmatprep.subr.bf16.mxu0 0
    %88 = vmatpush1.bf16.msra.mxu0 0
    %89 = vmatprep.subr.bf16.mxu0 0
    %90 = vmatpush1.bf16.msra.mxu0 0
    %91 = vmatprep.subr.bf16.mxu0 0
    %92 = vmatpush1.bf16.msra.mxu0 0
    %93 = vmatprep.subr.bf16.mxu0 0
    %94 = vmatpush1.bf16.msra.mxu0 0
    %95 = vmatprep.subr.bf16.mxu0 0
    %96 = vmatpush1.bf16.msra.mxu0 0
    %97 = vmatprep.subr.bf16.mxu0 0
    %98 = vmatpush1.bf16.msra.mxu0 0
    %99 = vmatprep.subr.bf16.mxu0 0
    %100 = vmatpush1.bf16.msra.mxu0 0
    %101 = vmatprep.subr.bf16.mxu0 0
    %102 = vmatpush1.bf16.msra.mxu0 0
    %103 = vmatprep.subr.bf16.mxu0 0
    %104 = vmatpush1.bf16.msra.mxu0 0
    %105 = vmatprep.mubr.bf16.mxu0 0
    %106 = vmatmul.mubr.bf16.gmra.mrb[0].mxu0 %v71
    %v107 = vpop.f32.mrb[0].mxu0
    %v108 = vadd.f32 %v55, %v107
    %v109 = vpop.f32.mrb[0].mxu0
    %v110 = vpop.f32.mrb[0].mxu0
    %v111 = vadd.f32 %v55, %v110
    %v112 = vpop.f32.mrb[0].mxu0
    %113 = vdwg.mxu0
    %114 = vst [vmem:[%s3] sm:$0xff] %v108
    %115 = vst [vmem:[%s3 + $0x8] sm:$0xff] %v111
    // Predicated region
    $region22: #{dim_converter_forward.1} parent=1 // pred_check
      _
    $region23: #{dim_converter_forward.1} parent=1 // pred_check_branch
      %117 = sbr.rel (0) target = $region25
    $region24: #{dim_converter_forward.1} parent=1 // pred_region
      _
    $region25: #{dim_converter_forward.1} parent=1 // pred_fallthru
      _
    // Predicated region
    $region26: #{dim_converter_forward.1} parent=1 // pred_check
      _
    $region27: #{dim_converter_forward.1} parent=1 // pred_check_branch
      %119 = sbr.rel (0) target = $region29
    $region28: #{dim_converter_forward.1} parent=1 // pred_region
      _
    $region29: #{dim_converter_forward.1} parent=1 // pred_fallthru
      _
    %120 = vsyncpa [#allocation3], 1
    %121 = vsyncpa [#allocation5], 1

</llo_original>
